<compile_context>
chip_gen: v6e
topology: v6e:2x2x1
jax: 0.10.0
libtpu: 0.0.40
codegen_flags: <defaults>
</compile_context>

<pallas_src>
import functools
import math

import jax
import jax.numpy as jnp
from jax.experimental import pallas as pl
from jax.experimental.pallas import tpu as pltpu

_LANES = 128
_MAX_BLOCK_ROWS = 1024  # 1024*128*4B = 512 KiB per f32 stream per buffer


# --------------------------------------------------------------------------
# Kernels
# --------------------------------------------------------------------------
def _drop_kernel_first(threshold, bits_ref, x_ref, x_out_ref, mask_out_ref):
    """First call: no previous mask.  Only x is processed."""
    # drop element  <=>  uniform_u32 < p * 2^32   (same law as rand() <= p)
    drop = bits_ref[...] < jnp.uint32(threshold)
    x = x_ref[...]
    keep = jnp.where(drop, jnp.zeros((), x.dtype), jnp.ones((), x.dtype))
    x_out_ref[...] = x * keep                      # x * (1 - mask)
    mask_out_ref[...] = drop.astype(jnp.int8)      # new mask, stored as int8


def _drop_kernel_with_last(threshold, bits_ref, x_ref, xhist_ref, last_ref,
                           x_out_ref, xhist_out_ref, mask_out_ref):
    """Steady state: drop x with a fresh mask, drop xhist with the previous one."""
    drop = bits_ref[...] < jnp.uint32(threshold)
    x = x_ref[...]
    keep = jnp.where(drop, jnp.zeros((), x.dtype), jnp.ones((), x.dtype))
    x_out_ref[...] = x * keep                      # x * (1 - mask)
    mask_out_ref[...] = drop.astype(jnp.int8)

    xh = xhist_ref[...]
    keep_h = jnp.where(last_ref[...] != 0,
                       jnp.zeros((), xh.dtype), jnp.ones((), xh.dtype))
    xhist_out_ref[...] = xh * keep_h               # xhist * (1 - last_mask)


# --------------------------------------------------------------------------
# Layout helpers
# --------------------------------------------------------------------------
def _layout(total):
    """Lane-dense 2-D layout: (rows, 128), tiled over rows."""
    rows = pl.cdiv(total, _LANES)
    block_rows = rows if rows <= _MAX_BLOCK_ROWS else _MAX_BLOCK_ROWS
    return rows, block_rows


def _to_tiles(a, rows):
    flat = a.reshape(-1)
    pad = rows * _LANES - flat.shape[0]
    if pad:
        flat = jnp.pad(flat, (0, pad))
    return flat.reshape(rows, _LANES)


# --------------------------------------------------------------------------
# Cached, jitted pallas_call builders (specialized on has_last at trace time)
# --------------------------------------------------------------------------
@functools.lru_cache(maxsize=None)
def _build_first_call(shape, x_dtype_name, threshold):
    x_dtype = jnp.dtype(x_dtype_name)
    total = math.prod(shape)
    rows, block_rows = _layout(total)
    grid = (pl.cdiv(rows, block_rows),)
    spec = pl.BlockSpec((block_rows, _LANES), lambda i: (i, 0))
    kernel = functools.partial(_drop_kernel_first, threshold)

    def fwd(key, x):
        bits = jax.random.bits(key, (rows, _LANES), dtype=jnp.uint32)
        x2 = _to_tiles(x, rows)
        x_o, mask2d = pl.pallas_call(
            kernel,
            grid=grid,
            in_specs=[spec, spec],
            out_specs=(spec, spec),
            out_shape=(jax.ShapeDtypeStruct((rows, _LANES), x_dtype),
                       jax.ShapeDtypeStruct((rows, _LANES), jnp.int8)),
            compiler_params=pltpu.CompilerParams(
                dimension_semantics=("parallel",)),
        )(bits, x2)
        return x_o.reshape(-1)[:total].reshape(shape), mask2d

    return jax.jit(fwd)


@functools.lru_cache(maxsize=None)
def _build_next_call(shape, x_dtype_name, h_dtype_name, threshold):
    x_dtype = jnp.dtype(x_dtype_name)
    h_dtype = jnp.dtype(h_dtype_name)
    total = math.prod(shape)
    rows, block_rows = _layout(total)
    grid = (pl.cdiv(rows, block_rows),)
    spec = pl.BlockSpec((block_rows, _LANES), lambda i: (i, 0))
    kernel = functools.partial(_drop_kernel_with_last, threshold)

    def fwd(key, x, xhist, last2d):
        bits = jax.random.bits(key, (rows, _LANES), dtype=jnp.uint32)
        x2 = _to_tiles(x, rows)
        h2 = _to_tiles(xhist, rows)
        x_o, h_o, mask2d = pl.pallas_call(
            kernel,
            grid=grid,
            in_specs=[spec, spec, spec, spec],
            out_specs=(spec, spec, spec),
            out_shape=(jax.ShapeDtypeStruct((rows, _LANES), x_dtype),
                       jax.ShapeDtypeStruct((rows, _LANES), h_dtype),
                       jax.ShapeDtypeStruct((rows, _LANES), jnp.int8)),
            compiler_params=pltpu.CompilerParams(
                dimension_semantics=("parallel",)),
        )(bits, x2, h2, last2d)
        x_out = x_o.reshape(-1)[:total].reshape(shape)
        h_out = h_o.reshape(-1)[:total].reshape(shape)
        return x_out, h_out, mask2d

    return jax.jit(fwd)


# --------------------------------------------------------------------------
# Module wrapper (keeps `last` mask as state, like the PyTorch module)
# --------------------------------------------------------------------------
class OnlineDropout:
    """JAX/Pallas port of the online Dropout block wrapped by SingleForward."""

    def __init__(self, p=0.5, seed=0):
        self.p = float(p)
        self.training = True
        # drop element <=> uniform_u32 < p * 2^32
        self._threshold = min(int(round(self.p * 4294967296.0)), 4294967295)
        self._key = jax.random.PRNGKey(seed)
        self._last2d = None        # previous mask, int8, padded (rows, 128)
        self._last_shape = None    # logical shape the mask was produced for
        self._last_dtype = None

    @property
    def last(self):
        """Previous mask as a float array of the shape/dtype it was made for."""
        if self._last2d is None:
            return None
        total = math.prod(self._last_shape)
        flat = self._last2d.reshape(-1)[:total]
        return flat.reshape(self._last_shape).astype(self._last_dtype)

    def __call__(self, inputs):
        if not self.training:
            # F.dropout(..., training=False) is the identity.
            return inputs

        x, xhist = inputs
        x_shape = tuple(x.shape)
        h_shape = tuple(xhist.shape)
        has_last = (self._last2d is not None and self._last_shape == h_shape)

        self._key, sub = jax.random.split(self._key)

        if has_last and x_shape == h_shape:
            fwd = _build_next_call(x_shape, str(x.dtype), str(xhist.dtype),
                                   self._threshold)
            x_out, h_out, mask2d = fwd(sub, x, xhist, self._last2d)
        else:
            fwd = _build_first_call(x_shape, str(x.dtype), self._threshold)
            x_out, mask2d = fwd(sub, x)
            if has_last:
                # TODO(synk): fuse the x.shape != xhist.shape case into the kernel.
                h_out = xhist * (1 - self.last).astype(xhist.dtype)
            else:
                h_out = xhist   # no valid previous mask: pass through untouched

        self._last2d = mask2d
        self._last_shape = x_shape
        self._last_dtype = x.dtype
        return x_out, h_out


# --------------------------------------------------------------------------
# Demo / self-check
# --------------------------------------------------------------------------
if __name__ == "__main__":
    key = jax.random.PRNGKey(0)
    kx, kh = jax.random.split(key)
    x = jax.random.normal(kx, (2, 4, 16, 16), dtype=jnp.float32)      # NCHW
    xhist = jax.random.normal(kh, (2, 4, 16, 16), dtype=jnp.float32)  # NCHW

    drop = OnlineDropout(p=0.5)

    # First training call: no previous mask -> xhist passes through unchanged.
    x1, h1 = drop((x, xhist))
    jax.block_until_ready(x1)
    jax.block_until_ready(h1)
    assert x1.shape == x.shape and h1.shape == xhist.shape
    assert bool(jnp.allclose(h1, xhist))            # no last mask on first call
    mask1 = drop.last
    assert bool(jnp.allclose(x1, x * (1.0 - mask1)))
    frac = float(jnp.mean(mask1))
    assert 0.3 < frac < 0.7                          # ~p of elements dropped

    # Second training call: previous mask is applied to xhist.
    x2, h2 = drop((x, xhist))
    jax.block_until_ready(x2)
    jax.block_until_ready(h2)
    assert bool(jnp.allclose(h2, xhist * (1.0 - mask1)))
    assert bool(jnp.allclose(x2, x * (1.0 - drop.last)))

    # Eval mode (SingleForward with training=False): identity.
    drop.training = False
    y = drop(x)
    jax.block_until_ready(y)
    assert bool(jnp.allclose(y, x))

    print("KERNEL_OK")
</pallas_src>

<mosaic_0001>
module attributes {stable_mosaic.version = 11 : i64} {
  func.func @_drop_kernel_first(%arg0: i32, %arg1: memref<16x128xi32, #tpu.memory_space<vmem>>, %arg2: memref<16x128xf32, #tpu.memory_space<vmem>>, %arg3: memref<16x128xf32, #tpu.memory_space<vmem>>, %arg4: memref<16x128xi8, #tpu.memory_space<vmem>>) attributes {dimension_semantics = [#tpu.dimension_semantics<parallel>], iteration_bounds = array<i64: 1>, scalar_prefetch = 0 : i64, scratch_operands = 0 : i64, tpu.core_type = #tpu.core_type<tc>, window_params = [{transform_indices = @transform_0, window_bounds = array<i64: 16, 128>}, {transform_indices = @transform_1, window_bounds = array<i64: 16, 128>}, {transform_indices = @transform_2, window_bounds = array<i64: 16, 128>}, {transform_indices = @transform_3, window_bounds = array<i64: 16, 128>}]} {
    %c0 = arith.constant 0 : index
    %c0_0 = arith.constant 0 : index
    %0 = vector.load %arg1[%c0, %c0_0] : memref<16x128xi32, #tpu.memory_space<vmem>>, vector<16x128xi32>
    %c-2147483648_i32 = arith.constant -2147483648 : i32
    %1 = vector.broadcast %c-2147483648_i32 : i32 to vector<16x128xi32>
    %2 = arith.cmpi ult, %0, %1 : vector<16x128xi32>
    %c0_1 = arith.constant 0 : index
    %c0_2 = arith.constant 0 : index
    %3 = vector.load %arg2[%c0_1, %c0_2] : memref<16x128xf32, #tpu.memory_space<vmem>>, vector<16x128xf32>
    %cst = arith.constant 0.000000e+00 : f32
    %cst_3 = arith.constant 1.000000e+00 : f32
    %4 = vector.broadcast %cst : f32 to vector<16x128xf32>
    %5 = vector.broadcast %cst_3 : f32 to vector<16x128xf32>
    %6 = arith.select %2, %4, %5 : vector<16x128xi1>, vector<16x128xf32>
    %7 = arith.mulf %3, %6 : vector<16x128xf32>
    %c0_4 = arith.constant 0 : index
    %c0_5 = arith.constant 0 : index
    %8 = vector.load %arg3[%c0_4, %c0_5] : memref<16x128xf32, #tpu.memory_space<vmem>>, vector<16x128xf32>
    tpu.vector_store %arg3[%c0_4, %c0_5], %7 {strides = array<i32>} : memref<16x128xf32, #tpu.memory_space<vmem>>, vector<16x128xf32>,
    %9 = arith.extui %2 : vector<16x128xi1> to vector<16x128xi8>
    %c0_6 = arith.constant 0 : index
    %c0_7 = arith.constant 0 : index
    %10 = vector.load %arg4[%c0_6, %c0_7] : memref<16x128xi8, #tpu.memory_space<vmem>>, vector<16x128xi8>
    tpu.vector_store %arg4[%c0_6, %c0_7], %9 {strides = array<i32>} : memref<16x128xi8, #tpu.memory_space<vmem>>, vector<16x128xi8>,
    return
  }
  func.func @transform_0(%arg0: i32) -> (i32, i32) {
    %c0_i32 = arith.constant 0 : i32
    %c0_i32_0 = arith.constant 0 : i32
    return %arg0, %c0_i32 : i32, i32
  }
  func.func @transform_1(%arg0: i32) -> (i32, i32) {
    %c0_i32 = arith.constant 0 : i32
    %c0_i32_0 = arith.constant 0 : i32
    return %arg0, %c0_i32 : i32, i32
  }
  func.func @transform_2(%arg0: i32) -> (i32, i32) {
    %c0_i32 = arith.constant 0 : i32
    %c0_i32_0 = arith.constant 0 : i32
    return %arg0, %c0_i32 : i32, i32
  }
  func.func @transform_3(%arg0: i32) -> (i32, i32) {
    %c0_i32 = arith.constant 0 : i32
    %c0_i32_0 = arith.constant 0 : i32
    return %arg0, %c0_i32 : i32, i32
  }
}

</mosaic_0001>

<llo_original>
// kernel: fwd.1
$region0: #{fwd.1}
  #allocation0 [shape = 'u32[]', space=smem, size = 0x4, offset = 0x4, fixed_abs, tag = 'smem constant byte address 0x4 - core index']
  #allocation1 [shape = 'u32[144,128]{1,0:T(1,128)}', space=vmem, size = 0x12000, scoped, tag = 'internal scratch']
  %s0 = inlined_call_operand.vmem [shape: u32[16,128], index: 0, kind: input, shape index: {}]
  %s1 = inlined_call_operand.vmem [shape: f32[16,128], index: 1, kind: input, shape index: {}]
  %s2 = inlined_call_operand.vmem [shape: f32[16,128], index: 2, kind: output, shape index: {0}]
  %s3 = inlined_call_operand.hbm [shape: s8[16,128], index: 3, kind: output, shape index: {1}]
  %4 = xla_tuple %s2, %s3
  %s5 = sld [smem:[#allocation0]]
  $region26: #{fwd.1} parent=0
    _
  %s7 = ssub.s32 1, %s5
  %s8 = scalar_select 0, %s7, %s5
  $region1: #{fwd.1} parent=0
    #allocation2 [shape = 'u8[2048]{0}', space=vmem, size = 0x800, scoped, tag = 'output window, operand 1, single buffered']
    #allocation3 [shape = 's32[1]{0}', space=sflag, size = 0x4, scoped, tag = 'scoped memory for fwd.1']
    %9 = vsyncpa [#allocation3], 0
    // Predicated region
    $region2: #{fwd.1} parent=1 // pred_check
      _
    $region3: #{fwd.1} parent=1 // pred_check_branch
      %11 = sbr.rel (0) target = $region5
    $region4: #{fwd.1} parent=1 // pred_region
      _
    $region5: #{fwd.1} parent=1 // pred_fallthru
      _
    // Predicated region
    $region6: #{fwd.1} parent=1 // pred_check
      _
    $region7: #{fwd.1} parent=1 // pred_check_branch
      %13 = sbr.rel (0) target = $region9
    $region8: #{fwd.1} parent=1 // pred_region
      _
    $region9: #{fwd.1} parent=1 // pred_fallthru
      _
    %v16 = vld [vmem:[%s0] sm:$0xff]
    %v17 = vld [vmem:[%s0 + $0x8] sm:$0xff]
    %vm18 = vcmp.lt.u32.totalorder %v16, 2147483648
    %vm19 = vcmp.lt.u32.totalorder %v17, 2147483648
    %v20 = vld [vmem:[%s1] sm:$0xff]
    %v21 = vld [vmem:[%s1 + $0x8] sm:$0xff]
    %v22 = vsel %vm18, 0.0, 1.0
    %v23 = vsel %vm19, 0.0, 1.0
    %v24 = vmul.f32 %v20, %v22
    %v25 = vmul.f32 %v21, %v23
    %26 = vst [vmem:[%s2] sm:$0xff] %v24
    %27 = vst [vmem:[%s2 + $0x8] sm:$0xff] %v25
    %vm28 = vmpackc.low %vm19, %vm18
    %vm29 = vmpackc.even %vm28, %vm28
    %v30 = vsel %vm29, 16843009, 0
    %v31 = vunpack.c.0.s8 %v30
    %v32 = vunpack.c.1.s8 %v30
    %v33 = vpack.c.b16 %v31, %v31
    %v34 = vpack.c.b8 %v33, %v33
    %v35 = vpack.c.b16 %v32, %v32
    %v36 = vpack.c.b8 %v35, %v35
    %37 = vst [vmem:[#allocation2] sm:$0x3] %v34
    %38 = vst [vmem:[#allocation2 + $0x2] sm:$0x3] %v36
    // Predicated region
    $region10: #{fwd.1} parent=1 // pred_check
      _
    $region11: #{fwd.1} parent=1 // pred_check_branch
      %40 = sbr.rel (0) target = $region13
    $region12: #{fwd.1} parent=1 // pred_region
      _
    $region13: #{fwd.1} parent=1 // pred_fallthru
      _
    // Predicated region
    $region14: #{fwd.1} parent=1 // pred_check
      _
    $region15: #{fwd.1} parent=1 // pred_check_branch
      %42 = sbr.rel (0) target = $region17
    $region16: #{fwd.1} parent=1 // pred_region
      %s44 = ssub.s32 64, 64
      %45 = vsyncadd [#allocation3], %s44
      %s46 = sshll.u32 [#allocation2], 4
      %s47 = int_to_ptr.vmem [resolvable:$true] %s46
      %52 = dma.vmem_to_hbm [thread:$0]  %s47, 64, %s3, [#allocation3], 32, 32, 2
    $region17: #{fwd.1} parent=1 // pred_fallthru
      _
    // Predicated region
    $region18: #{fwd.1} parent=1 // pred_check
      _
    $region19: #{fwd.1} parent=1 // pred_check_branch
      %54 = sbr.rel (0) target = $region21
    $region20: #{fwd.1} parent=1 // pred_region
      _
    $region21: #{fwd.1} parent=1 // pred_fallthru
      _
    // Predicated region
    $region22: #{fwd.1} parent=1 // pred_check
      _
    $region23: #{fwd.1} parent=1 // pred_check_branch
      %56 = sbr.rel (0) target = $region25
    $region24: #{fwd.1} parent=1 // pred_region
      %57 = dma.done [#allocation3], 64
    $region25: #{fwd.1} parent=1 // pred_fallthru
      _
    %58 = vsyncpa [#allocation3], 1

</llo_original>
